<compile_context>
chip_gen: v7x
topology: tpu7x:2x2x1
jax: 0.10.0
libtpu: 0.0.40
codegen_flags: <defaults>
</compile_context>

<pallas_src>
import jax
import jax.numpy as jnp
from jax.experimental import pallas as pl
from jax.experimental.pallas import tpu as pltpu


# ----------------------------- kernel body ----------------------------------

def _conv1x1_kernel(x_ref, w_ref, b_ref, o_ref, acc_ref):
    # x_ref : (tck, tn)   input-channel tile x spatial tile (lanes)
    # w_ref : (tco, tck)  1x1 conv weight tile
    # b_ref : (tco, 1)    bias tile (broadcast over lanes)
    # o_ref : (tco, tn)   output-channel tile x spatial tile
    # acc_ref: (tco, tn)  f32 accumulator, resident across the Cin axis
    k = pl.program_id(3)

    @pl.when(k == 0)
    def _():
        acc_ref[...] = jnp.zeros_like(acc_ref)

    acc_ref[...] += jnp.dot(w_ref[...], x_ref[...],
                            preferred_element_type=jnp.float32)

    @pl.when(k == pl.num_programs(3) - 1)
    def _():
        o_ref[...] = (acc_ref[...] + b_ref[...]).astype(o_ref.dtype)


# ----------------------------- tiling helpers --------------------------------

def _pick_channel_tile(C, cap=512):
    """Tile a channel dim so a single weight block stays a few MiB at most.
    Returns C itself when it is small or has no nice 128-multiple divisor."""
    if C <= cap:
        return C
    for t in (512, 384, 256, 128):
        if C % t == 0:
            return t
    return C


def _pick_spatial_tile(S_pad, tck, tco, itemsize,
                       n_other_parallel_steps,
                       budget_bytes=24 * 1024 * 1024,
                       min_parallel_steps=4):
    """Largest lane-dense (multiple-of-128) spatial tile that divides S_pad and
    keeps the full double-buffered working set (x + out tiles, weight + bias
    blocks, f32 accumulator) within `budget_bytes`.  Additionally capped so the
    total number of *parallel* grid steps is >= min_parallel_steps (v7x 2-TC)."""
    # Per lane-column: double-buffered x tile + out tile, plus f32 accumulator.
    per_col = 2 * (tck + tco) * itemsize + tco * 4
    # Fixed per-step blocks: double-buffered weight + bias.
    fixed = 2 * (tco * tck + tco) * itemsize
    avail = max(budget_bytes - fixed, 128 * per_col)
    max_tn = max(128, (avail // per_col) // 128 * 128)

    # Divisors of S_pad that are multiples of 128 (S_pad is a multiple of 128).
    divs = [d for d in range(128, S_pad + 1, 128) if S_pad % d == 0]
    tn = max([d for d in divs if d <= max_tn], default=divs[0])

    # Keep at least `min_parallel_steps` parallel grid steps for 2-TC sharding.
    while (n_other_parallel_steps * (S_pad // tn) < min_parallel_steps
           and tn > 128):
        smaller = [d for d in divs if d < tn]
        if not smaller:
            break
        tn = max(smaller)
    return tn


# ----------------------------- wrapper ---------------------------------------

def linear_forward(x_nchw, weight, bias):
    """Forward pass of `linear` (Conv2d with 1x1 kernel + bias), NCHW in/out."""
    B, Cin, H, W = x_nchw.shape
    Cout = weight.shape[0]
    S = H * W
    itemsize = x_nchw.dtype.itemsize

    # ---- glue: free reshapes + (only if needed) lane padding of S to 128 ----
    x2 = x_nchw.reshape(B, Cin, S)             # (B, Cin, S)
    w2 = weight.reshape(Cout, Cin)             # (Cout, Cin, 1, 1) -> (Cout, Cin)
    b2 = bias.reshape(Cout, 1)                 # (Cout, 1)

    S_pad = ((S + 127) // 128) * 128
    if S_pad != S:
        x2 = jnp.pad(x2, ((0, 0), (0, 0), (0, S_pad - S)))

    # ---- channel / spatial tiling ----
    tco = _pick_channel_tile(Cout)             # = Cout for small channel counts
    tck = _pick_channel_tile(Cin)              # = Cin  for small channel counts
    n_other_parallel = B * (Cout // tco)
    tn = _pick_spatial_tile(S_pad, tck, tco, itemsize, n_other_parallel)

    grid = (B, Cout // tco, S_pad // tn, Cin // tck)

    # ---- explicit VMEM limit from the real working set (+ slack) ----
    working_set = (2 * (tck * tn + tco * tn + tco * tck + tco) * itemsize
                   + tco * tn * 4)             # f32 accumulator scratch
    vmem_limit = int(min(max(32 * 1024 * 1024, working_set + 4 * 1024 * 1024),
                         100 * 1024 * 1024))

    # ---- tell XLA this call is bandwidth-bound ----
    cost = pl.CostEstimate(
        flops=2 * B * S * Cin * Cout,
        bytes_accessed=(B * S * (Cin + Cout) + Cout * Cin + Cout) * itemsize,
        transcendentals=0)

    out = pl.pallas_call(
        _conv1x1_kernel,
        out_shape=jax.ShapeDtypeStruct((B, Cout, S_pad), x_nchw.dtype),
        grid_spec=pltpu.PrefetchScalarGridSpec(
            num_scalar_prefetch=0,
            grid=grid,
            in_specs=[
                # batch dim squeezed out of the kernel view
                pl.BlockSpec((None, tck, tn), lambda b, co, s, k: (b, k, s)),
                pl.BlockSpec((tco, tck), lambda b, co, s, k: (co, k)),
                pl.BlockSpec((tco, 1), lambda b, co, s, k: (co, 0)),
            ],
            out_specs=pl.BlockSpec((None, tco, tn),
                                   lambda b, co, s, k: (b, co, s)),
            scratch_shapes=[pltpu.VMEM((tco, tn), jnp.float32)],
        ),
        compiler_params=pltpu.CompilerParams(
            dimension_semantics=("parallel", "parallel", "parallel",
                                 "arbitrary"),
            vmem_limit_bytes=vmem_limit),
        cost_estimate=cost,
    )(x2, w2, b2)

    if S_pad != S:
        out = out[:, :, :S]
    return out.reshape(B, Cout, H, W)


# ----------------------------- reference & test ------------------------------

def _reference(x_nchw, weight, bias):
    # Pure-JAX reference: Conv2d(c_in, c_out, (1, 1), padding=(0, 0)) + bias.
    out = jax.lax.conv_general_dilated(
        x_nchw, weight,
        window_strides=(1, 1),
        padding=((0, 0), (0, 0)),
        dimension_numbers=("NCHW", "OIHW", "NCHW"))
    return out + bias[None, :, None, None]


if __name__ == "__main__":
    # Small deterministic example consistent with the module.
    B, Cin, Cout, H, W = 2, 4, 8, 16, 16

    key = jax.random.PRNGKey(0)
    kx, kw, kb = jax.random.split(key, 3)
    x = jax.random.normal(kx, (B, Cin, H, W), dtype=jnp.float32)

    # Deterministic "Conv2d(c_in, c_out, (1, 1))" parameters (PyTorch-style init).
    fan_in = Cin * 1 * 1
    bound = 1.0 / (fan_in ** 0.5)
    weight = jax.random.uniform(kw, (Cout, Cin, 1, 1), jnp.float32, -bound, bound)
    bias = jax.random.uniform(kb, (Cout,), jnp.float32, -bound, bound)

    out = linear_forward(x, weight, bias)
    out = jax.block_until_ready(out)

    ref = _reference(x, weight, bias)
    assert out.shape == ref.shape == (B, Cout, H, W)
    assert jnp.allclose(out, ref, atol=1e-5, rtol=1e-5)

    print("KERNEL_OK")
</pallas_src>

<mosaic_0001>
module attributes {stable_mosaic.version = 11 : i64} {
  func.func @_conv1x1_kernel(%arg0: i32, %arg1: i32, %arg2: i32, %arg3: i32, %arg4: memref<1x4x128xf32, #tpu.memory_space<vmem>>, %arg5: memref<8x4xf32, #tpu.memory_space<vmem>>, %arg6: memref<8x1xf32, #tpu.memory_space<vmem>>, %arg7: memref<1x8x128xf32, #tpu.memory_space<vmem>>, %arg8: memref<8x128xf32, #tpu.memory_space<vmem>>) attributes {dimension_semantics = [#tpu.dimension_semantics<parallel>, #tpu.dimension_semantics<parallel>, #tpu.dimension_semantics<parallel>, #tpu.dimension_semantics<arbitrary>], iteration_bounds = array<i64: 2, 1, 2, 1>, scalar_prefetch = 0 : i64, scratch_operands = 1 : i64, tpu.core_type = #tpu.core_type<tc>, window_params = [{transform_indices = @transform_0, window_bounds = array<i64: 1, 4, 128>}, {transform_indices = @transform_1, window_bounds = array<i64: 8, 4>}, {transform_indices = @transform_2, window_bounds = array<i64: 8, 1>}, {transform_indices = @transform_3, window_bounds = array<i64: 1, 8, 128>}]} {
    %c0_i32 = arith.constant 0 : i32
    %0 = arith.cmpi eq, %arg3, %c0_i32 : i32
    %1 = arith.extui %0 : i1 to i32
    %c0_i32_0 = arith.constant 0 : i32
    %2 = arith.cmpi ne, %1, %c0_i32_0 : i32
    scf.if %2 {
      %cst_11 = arith.constant 0.000000e+00 : f32
      %13 = vector.broadcast %cst_11 : f32 to vector<8x128xf32>
      %c0_12 = arith.constant 0 : index
      %c0_13 = arith.constant 0 : index
      %14 = vector.load %arg8[%c0_12, %c0_13] : memref<8x128xf32, #tpu.memory_space<vmem>>, vector<8x128xf32>
      tpu.vector_store %arg8[%c0_12, %c0_13], %13 {strides = array<i32>} : memref<8x128xf32, #tpu.memory_space<vmem>>, vector<8x128xf32>,
    } else {
    }
    %c0 = arith.constant 0 : index
    %c0_1 = arith.constant 0 : index
    %3 = vector.load %arg8[%c0, %c0_1] : memref<8x128xf32, #tpu.memory_space<vmem>>, vector<8x128xf32>
    %c0_2 = arith.constant 0 : index
    %c0_3 = arith.constant 0 : index
    %4 = vector.load %arg5[%c0_2, %c0_3] : memref<8x4xf32, #tpu.memory_space<vmem>>, vector<8x4xf32>
    %c0_4 = arith.constant 0 : index
    %c0_5 = arith.constant 0 : index
    %c0_6 = arith.constant 0 : index
    %5 = vector.load %arg4[%c0_4, %c0_5, %c0_6] : memref<1x4x128xf32, #tpu.memory_space<vmem>>, vector<1x4x128xf32>
    %6 = vector.shape_cast %5 : vector<1x4x128xf32> to vector<4x128xf32>
    %cst = arith.constant dense<0.000000e+00> : vector<8x128xf32>
    %7 = tpu.matmul %4, %6, %cst {dimension_numbers = #tpu.dot_dimension_numbers<[1], [0], [0], [1], [0, 0, 1, 1], [], []>} : vector<8x4xf32>, vector<4x128xf32>, vector<8x128xf32> -> vector<8x128xf32>
    %8 = arith.addf %3, %7 : vector<8x128xf32>
    %c0_7 = arith.constant 0 : index
    %c0_8 = arith.constant 0 : index
    %9 = vector.load %arg8[%c0_7, %c0_8] : memref<8x128xf32, #tpu.memory_space<vmem>>, vector<8x128xf32>
    tpu.vector_store %arg8[%c0_7, %c0_8], %8 {strides = array<i32>} : memref<8x128xf32, #tpu.memory_space<vmem>>, vector<8x128xf32>,
    %c0_i32_9 = arith.constant 0 : i32
    %10 = arith.cmpi eq, %arg3, %c0_i32_9 : i32
    %11 = arith.extui %10 : i1 to i32
    %c0_i32_10 = arith.constant 0 : i32
    %12 = arith.cmpi ne, %11, %c0_i32_10 : i32
    scf.if %12 {
      %c0_11 = arith.constant 0 : index
      %c0_12 = arith.constant 0 : index
      %13 = vector.load %arg8[%c0_11, %c0_12] : memref<8x128xf32, #tpu.memory_space<vmem>>, vector<8x128xf32>
      %c0_13 = arith.constant 0 : index
      %c0_14 = arith.constant 0 : index
      %14 = vector.load %arg6[%c0_13, %c0_14] : memref<8x1xf32, #tpu.memory_space<vmem>>, vector<8x1xf32>
      %15 = vector.broadcast %14 : vector<8x1xf32> to vector<8x128xf32>
      %16 = arith.addf %13, %15 : vector<8x128xf32>
      %c0_15 = arith.constant 0 : index
      %c0_16 = arith.constant 0 : index
      %c0_17 = arith.constant 0 : index
      %17 = vector.load %arg7[%c0_15, %c0_16, %c0_17] : memref<1x8x128xf32, #tpu.memory_space<vmem>>, vector<1x8x128xf32>
      %18 = vector.shape_cast %17 : vector<1x8x128xf32> to vector<8x128xf32>
      %19 = vector.shape_cast %16 : vector<8x128xf32> to vector<1x8x128xf32>
      tpu.vector_store %arg7[%c0_15, %c0_16, %c0_17], %19 {strides = array<i32>} : memref<1x8x128xf32, #tpu.memory_space<vmem>>, vector<1x8x128xf32>,
    } else {
    }
    return
  }
  func.func @transform_0(%arg0: i32, %arg1: i32, %arg2: i32, %arg3: i32) -> (i32, i32, i32) {
    %c0_i32 = arith.constant 0 : i32
    return %arg0, %arg3, %arg2 : i32, i32, i32
  }
  func.func @transform_1(%arg0: i32, %arg1: i32, %arg2: i32, %arg3: i32) -> (i32, i32) {
    %c0_i32 = arith.constant 0 : i32
    return %arg1, %arg3 : i32, i32
  }
  func.func @transform_2(%arg0: i32, %arg1: i32, %arg2: i32, %arg3: i32) -> (i32, i32) {
    %c0_i32 = arith.constant 0 : i32
    %c0_i32_0 = arith.constant 0 : i32
    return %arg1, %c0_i32 : i32, i32
  }
  func.func @transform_3(%arg0: i32, %arg1: i32, %arg2: i32, %arg3: i32) -> (i32, i32, i32) {
    %c0_i32 = arith.constant 0 : i32
    return %arg0, %arg1, %arg2 : i32, i32, i32
  }
}

</mosaic_0001>

<llo_original>
// kernel: tpu_custom_call.1
$region0: #{tpu_custom_call.1}
  #allocation0 [shape = 'u32[]', space=smem, size = 0x4, offset = 0x4, fixed_abs, tag = 'smem constant byte address 0x4 - core index']
  #allocation1 [shape = 'u32[144,128]{1,0:T(1,128)}', space=vmem, size = 0x12000, scoped, tag = 'internal scratch']
  #allocation2 [shape = 'f32[8,128]{1,0:T(8,128)}', space=vmem, size = 0x1000, scoped, tag = 'scratch operand']
  %s0 = inlined_call_operand.vmem [shape: f32[2,4,256], index: 0, kind: input, shape index: {}]
  %s1 = inlined_call_operand.vmem [shape: f32[8,4], index: 1, kind: input, shape index: {}]
  %s2 = inlined_call_operand.vmem [shape: f32[8,1], index: 2, kind: input, shape index: {}]
  %s3 = inlined_call_operand.hbm [shape: f32[2,8,256], index: 3, kind: output, shape index: {}]
  %s4 = sld [smem:[#allocation0]]
  $region53: #{tpu_custom_call.1} parent=0
    _
  %s6 = ssub.s32 1, %s4
  %s7 = scalar_select 0, %s6, %s4
  $region1: #{tpu_custom_call.1} parent=0
    #allocation3 [shape = 'u8[8192]{0}', space=vmem, size = 0x2000, scoped, tag = 'output window, operand 0']
    #allocation4 [shape = 's32[2]{0}', space=sflag, size = 0x8, scoped, tag = 'scoped memory for tpu_custom_call.1']
    %8 = vsyncpa [#allocation4], 0
    %s9 = scalar_lea.sflag [#allocation4], 1
    %10 = vsyncpa %s9, 0
    loop: start=0, step=1, limit=6
    $region2: #{tpu_custom_call.1} parent=1 // loop_pre_header
      _
    $region3: #{tpu_custom_call.1} parent=1 // loop_header
      %s12 = sphi 0, %s16
      %p13 = scmp.ge.s32.totalorder %s12, 6
      %s19 = sphi 0, %s45
      %s20 = sphi 0, %s41
      %s21 = sphi 0, %s37
      %s22 = sphi 0, %s33
      %s23 = sphi 0, %s19
      %s24 = sphi 0, %s20
      %s25 = sphi 0, %s21
      %s26 = sphi 0, %s22
      %s27 = sphi 0, %s23
      %s28 = sphi 0, %s24
      %s29 = sphi 0, %s25
      %s30 = sphi 0, %s26
      %s52 = sphi 0, %s54
      %s55 = sphi 0, %s52
      %s56 = sphi 0, %s55
      %s72 = sphi 0, %s56
      %s80 = sphi 0, %s82
      %s83 = sphi 0, %s80
      %s84 = sphi 0, %s83
      %s100 = sphi 0, %s84
      %s106 = sphi 0, %s108
      %s109 = sphi 0, %s106
      %s110 = sphi 0, %s109
      %s126 = sphi 0, %s110
      %s136 = sphi 0, %s138
      %s139 = sphi 0, %s136
      %s140 = sphi 0, %s139
      %s156 = sphi 0, %s140
    $region4: #{tpu_custom_call.1} parent=1 // loop_header_branch
      %15 = sbr.rel (%p13) target = $region8
    $region5: #{tpu_custom_call.1} parent=1 // loop_body
      %s17 = ssub.s32 %s12, 1
      %s18 = ssub.s32 %s12, 2
      %s31 = sadd.s32 1, %s22
      %p32 = scmp.ge.s32.totalorder %s31, 1
      %s33 = scalar_select %p32, 0, %s31
      %s34 = sadd.s32 1, %s21
      %s35 = scalar_select %p32, %s34, %s21
      %p36 = scmp.ge.s32.totalorder %s35, 2
      %s37 = scalar_select %p36, 0, %s35
      %s38 = sadd.s32 1, %s20
      %s39 = scalar_select %p36, %s38, %s20
      %p40 = scmp.ge.s32.totalorder %s39, 1
      %s41 = scalar_select %p40, 0, %s39
      %s42 = sadd.s32 1, %s19
      %s43 = scalar_select %p40, %s42, %s19
      %p44 = scmp.ge.s32.totalorder %s43, 2
      %s45 = scalar_select %p44, 0, %s43
      %s46 = ssub.s32 %s19, %s45
      %s47 = ssub.s32 %s22, %s33
      %s48 = sor.u32 %s46, %s47
      %s49 = ssub.s32 %s21, %s37
      %s50 = sor.u32 %s48, %s49
      %p51 = scmp.eq.s32.totalorder %s50, 0
      %s53 = sadd.s32 %s52, 1
      %s54 = scalar_select %p51, %s52, %s53
      %p57 = pneg %p51
      %p58 = scmp.eq.s32.totalorder %s12, 3
      %p59 = por %p57, %p58
      %p60 = scmp.ne.s32.totalorder %s52, %s55
      %p61 = scmp.eq.s32.totalorder %s12, 0
      %p62 = por %p60, %p61
      %p63 = scmp.ne.s32.totalorder %s52, %s55
      %p64 = scmp.eq.s32.totalorder %s17, 3
      %p65 = por %p63, %p64
      %p66 = scmp.ne.s32.totalorder %s55, %s56
      %p67 = scmp.eq.s32.totalorder %s17, 0
      %p68 = por %p66, %p67
      %p69 = scmp.ne.s32.totalorder %s55, %s56
      %p70 = scmp.eq.s32.totalorder %s18, 3
      %p71 = por %p69, %p70
      %p73 = scmp.ne.s32.totalorder %s56, %s72
      %p74 = scmp.eq.s32.totalorder %s18, 0
      %p75 = por %p73, %p74
      %s76 = ssub.s32 %s20, %s41
      %s77 = ssub.s32 %s22, %s33
      %s78 = sor.u32 %s76, %s77
      %p79 = scmp.eq.s32.totalorder %s78, 0
      %s81 = sadd.s32 %s80, 1
      %s82 = scalar_select %p79, %s80, %s81
      %p85 = pneg %p79
      %p86 = scmp.eq.s32.totalorder %s12, 3
      %p87 = por %p85, %p86
      %p88 = scmp.ne.s32.totalorder %s80, %s83
      %p89 = scmp.eq.s32.totalorder %s12, 0
      %p90 = por %p88, %p89
      %p91 = scmp.ne.s32.totalorder %s80, %s83
      %p92 = scmp.eq.s32.totalorder %s17, 3
      %p93 = por %p91, %p92
      %p94 = scmp.ne.s32.totalorder %s83, %s84
      %p95 = scmp.eq.s32.totalorder %s17, 0
      %p96 = por %p94, %p95
      %p97 = scmp.ne.s32.totalorder %s83, %s84
      %p98 = scmp.eq.s32.totalorder %s18, 3
      %p99 = por %p97, %p98
      %p101 = scmp.ne.s32.totalorder %s84, %s100
      %p102 = scmp.eq.s32.totalorder %s18, 0
      %p103 = por %p101, %p102
      %s104 = ssub.s32 %s20, %s41
      %p105 = scmp.eq.s32.totalorder %s104, 0
      %s107 = sadd.s32 %s106, 1
      %s108 = scalar_select %p105, %s106, %s107
      %p111 = pneg %p105
      %p112 = scmp.eq.s32.totalorder %s12, 3
      %p113 = por %p111, %p112
      %p114 = scmp.ne.s32.totalorder %s106, %s109
      %p115 = scmp.eq.s32.totalorder %s12, 0
      %p116 = por %p114, %p115
      %p117 = scmp.ne.s32.totalorder %s106, %s109
      %p118 = scmp.eq.s32.totalorder %s17, 3
      %p119 = por %p117, %p118
      %p120 = scmp.ne.s32.totalorder %s109, %s110
      %p121 = scmp.eq.s32.totalorder %s17, 0
      %p122 = por %p120, %p121
      %p123 = scmp.ne.s32.totalorder %s109, %s110
      %p124 = scmp.eq.s32.totalorder %s18, 3
      %p125 = por %p123, %p124
      %p127 = scmp.ne.s32.totalorder %s110, %s126
      %p128 = scmp.eq.s32.totalorder %s18, 0
      %p129 = por %p127, %p128
      %s130 = ssub.s32 %s19, %s45
      %s131 = ssub.s32 %s20, %s41
      %s132 = sor.u32 %s130, %s131
      %s133 = ssub.s32 %s21, %s37
      %s134 = sor.u32 %s132, %s133
      %p135 = scmp.eq.s32.totalorder %s134, 0
      %s137 = sadd.s32 %s136, 1
      %s138 = scalar_select %p135, %s136, %s137
      %p141 = pneg %p135
      %p142 = scmp.eq.s32.totalorder %s12, 3
      %p143 = por %p141, %p142
      %p144 = scmp.ne.s32.totalorder %s136, %s139
      %p145 = scmp.eq.s32.totalorder %s12, 0
      %p146 = por %p144, %p145
      %p147 = scmp.ne.s32.totalorder %s136, %s139
      %p148 = scmp.eq.s32.totalorder %s17, 3
      %p149 = por %p147, %p148
      %p150 = scmp.ne.s32.totalorder %s139, %s140
      %p151 = scmp.eq.s32.totalorder %s17, 0
      %p152 = por %p150, %p151
      %p153 = scmp.ne.s32.totalorder %s139, %s140
      %p154 = scmp.eq.s32.totalorder %s18, 3
      %p155 = por %p153, %p154
      %p157 = scmp.ne.s32.totalorder %s140, %s156
      %p158 = scmp.eq.s32.totalorder %s18, 0
      %p159 = por %p157, %p158
      %p160 = scmp.le.s32.totalorder 1, %s12
      %p161 = scmp.lt.s32.totalorder %s12, 5
      %p162 = pnand %p160, %p161
      %p163 = pneg %p162
      // Predicated region
      $region9: #{tpu_custom_call.1} parent=5 // pred_check
        _
      $region10: #{tpu_custom_call.1} parent=5 // pred_check_branch
        %165 = sbr.rel (%p162) target = $region12
      $region11: #{tpu_custom_call.1} parent=5 // pred_region
        %s166 = ssub.s32 %s12, 1
        // Predicated region
        $region13: #{tpu_custom_call.1} parent=11 // pred_check
          %p167 = pneg %p96
        $region14: #{tpu_custom_call.1} parent=11 // pred_check_branch
          %169 = sbr.rel (%p167) target = $region16
        $region15: #{tpu_custom_call.1} parent=11 // pred_region
          %p170 = scmp.lt.s32.totalorder %s24, 0
          %s171 = scalar_select %p170, %s24, 0
          %p172 = scmp.lt.s32.totalorder %s26, 0
          %s173 = scalar_select %p172, %s26, 0
          %s174 = sadd.s32 %s173, %s171
          %s175 = smul.addr %s174, 8
          %s176 = scalar_lea.vmem %s1, %s175
        $region16: #{tpu_custom_call.1} parent=11 // pred_fallthru
          _
        // Predicated region
        $region17: #{tpu_custom_call.1} parent=11 // pred_check
          %p177 = pneg %p122
        $region18: #{tpu_custom_call.1} parent=11 // pred_check_branch
          %179 = sbr.rel (%p177) target = $region20
        $region19: #{tpu_custom_call.1} parent=11 // pred_region
          %p180 = scmp.lt.s32.totalorder %s24, 0
          %s181 = scalar_select %p180, %s24, 0
          %s182 = smul.addr %s181, 8
          %s183 = scalar_lea.vmem %s2, %s182
        $region20: #{tpu_custom_call.1} parent=11 // pred_fallthru
          _
      $region12: #{tpu_custom_call.1} parent=5 // pred_fallthru
        _
      %p184 = scmp.lt.s32.totalorder %s12, 4
      // Predicated region
      $region21: #{tpu_custom_call.1} parent=5 // pred_check
        %p185 = pneg %p184
      $region22: #{tpu_custom_call.1} parent=5 // pred_check_branch
        %187 = sbr.rel (%p185) target = $region24
      $region23: #{tpu_custom_call.1} parent=5 // pred_region
        // Predicated region
        $region25: #{tpu_custom_call.1} parent=23 // pred_check
          %p188 = pneg %p62
        $region26: #{tpu_custom_call.1} parent=23 // pred_check_branch
          %190 = sbr.rel (%p188) target = $region28
        $region27: #{tpu_custom_call.1} parent=23 // pred_region
          %p191 = scmp.lt.s32.totalorder %s19, 1
          %s192 = scalar_select %p191, %s19, 1
          %p193 = scmp.lt.s32.totalorder %s22, 0
          %s194 = scalar_select %p193, %s22, 0
          %p195 = scmp.lt.s32.totalorder %s21, 1
          %s196 = scalar_select %p195, %s21, 1
          %s197 = smul.addr %s194, 2
          %s198 = sadd.s32 %s196, %s197
          %s199 = smul.addr %s192, 2
          %s200 = sadd.s32 %s198, %s199
          %s201 = smul.addr %s200, 4
          %s202 = scalar_lea.vmem %s0, %s201
        $region28: #{tpu_custom_call.1} parent=23 // pred_fallthru
          _
      $region24: #{tpu_custom_call.1} parent=5 // pred_fallthru
        _
      %p203 = scmp.le.s32.totalorder 1, %s12
      %p204 = scmp.lt.s32.totalorder %s12, 5
      %p205 = pnand %p203, %p204
      %p206 = pneg %p205
      // Predicated region
      $region29: #{tpu_custom_call.1} parent=5 // pred_check
        _
      $region30: #{tpu_custom_call.1} parent=5 // pred_check_branch
        %208 = sbr.rel (%p205) target = $region32
      $region31: #{tpu_custom_call.1} parent=5 // pred_region
        %s209 = ssub.s32 %s12, 1
        %p210 = scmp.lt.s32.totalorder %s23, 1
        %s211 = scalar_select %p210, %s23, 1
        %p212 = scmp.lt.s32.totalorder %s26, 0
        %s213 = scalar_select %p212, %s26, 0
        %p214 = scmp.lt.s32.totalorder %s25, 1
        %s215 = scalar_select %p214, %s25, 1
        %s216 = smul.addr %s213, 2
        %s217 = sadd.s32 %s215, %s216
        %s218 = smul.addr %s211, 2
        %s219 = sadd.s32 %s217, %s218
        %s220 = smul.addr %s219, 4
        %s221 = scalar_lea.vmem %s0, %s220
        %p222 = pneg %p68
        %p223 = pneg %p65
        %p224 = scmp.lt.s32.totalorder %s24, 0
        %s225 = scalar_select %p224, %s24, 0
        %p226 = scmp.lt.s32.totalorder %s26, 0
        %s227 = scalar_select %p226, %s26, 0
        %s228 = sadd.s32 %s227, %s225
        %s229 = smul.addr %s228, 8
        %s230 = scalar_lea.vmem %s1, %s229
        %p231 = pneg %p96
        %p232 = pneg %p93
        %p233 = scmp.lt.s32.totalorder %s24, 0
        %s234 = scalar_select %p233, %s24, 0
        %s235 = smul.addr %s234, 8
        %s236 = scalar_lea.vmem %s2, %s235
        %p237 = pneg %p122
        %p238 = pneg %p119
        %p239 = pneg %p152
        %p240 = pneg %p149
        %s241 = sand.u32 %s139, 1
        %s242 = scalar_lea.sflag [#allocation4], %s241
        %s243 = sand.u32 %s139, 1
        %s244 = smul.addr %s243, 8
        %s245 = scalar_lea.vmem [#allocation3], %s244
        %p246 = scmp.lt.s32.totalorder %s23, 1
        %s247 = scalar_select %p246, %s23, 1
        %p248 = scmp.lt.s32.totalorder %s26, 0
        %s249 = scalar_select %p248, %s26, 0
        %p250 = scmp.lt.s32.totalorder %s25, 1
        %s251 = scalar_select %p250, %s25, 1
        %s252 = smul.addr %s249, 2
        %s253 = sadd.s32 %s251, %s252
        %s254 = smul.addr %s247, 2
        %s255 = sadd.s32 %s253, %s254
        %s256 = smul.addr %s255, 4
        %s257 = scalar_lea.vmem %s0, %s256
        %p258 = scmp.lt.s32.totalorder %s24, 0
        %s259 = scalar_select %p258, %s24, 0
        %p260 = scmp.lt.s32.totalorder %s26, 0
        %s261 = scalar_select %p260, %s26, 0
        %s262 = sadd.s32 %s261, %s259
        %s263 = smul.addr %s262, 8
        %s264 = scalar_lea.vmem %s1, %s263
        %p265 = scmp.lt.s32.totalorder %s24, 0
        %s266 = scalar_select %p265, %s24, 0
        %s267 = smul.addr %s266, 8
        %s268 = scalar_lea.vmem %s2, %s267
        %p269 = scmp.eq.s32.totalorder %s26, 0
        // Predicated region
        $region33: #{tpu_custom_call.1} parent=31 // pred_check
          %p270 = pneg %p269
        $region34: #{tpu_custom_call.1} parent=31 // pred_check_branch
          %272 = sbr.rel (%p270) target = $region36
        $region35: #{tpu_custom_call.1} parent=31 // pred_region
          %273 = vst [vmem:[#allocation2] sm:$0xff] 0.0
        $region36: #{tpu_custom_call.1} parent=31 // pred_fallthru
          _
        %v274 = vld [vmem:[#allocation2] sm:$0xff]
        %v275 = vld [vmem:[%s264] sm:$0xff]
        %v276 = vld [vmem:[%s257] sm:$0xf]
        %vm277 = vcmask 31744
        %v279 = vsel %vm277, %v275, 0
        %vm281 = vcmask 1043456
        %v283 = vsel %vm281, %v276, 0
        %285 = vmatprep.subr.mxu0 0.0
        %286 = vmatpush1.msra.mxu0 %v283
        %287 = vmatprep.subr.mxu0 0.0
        %288 = vmatpush1.msra.mxu0 0.0
        %289 = vmatprep.subr.mxu0 0.0
        %290 = vmatpush1.msra.mxu0 0.0
        %291 = vmatprep.subr.mxu0 0.0
        %292 = vmatpush1.msra.mxu0 0.0
        %293 = vmatprep.subr.mxu0 0.0
        %294 = vmatpush1.msra.mxu0 0.0
        %295 = vmatprep.subr.mxu0 0.0
        %296 = vmatpush1.msra.mxu0 0.0
        %297 = vmatprep.subr.mxu0 0.0
        %298 = vmatpush1.msra.mxu0 0.0
        %299 = vmatprep.subr.mxu0 0.0
        %300 = vmatpush1.msra.mxu0 0.0
        %301 = vmatprep.subr.mxu0 0.0
        %302 = vmatpush1.msra.mxu0 0.0
        %303 = vmatprep.subr.mxu0 0.0
        %304 = vmatpush1.msra.mxu0 0.0
        %305 = vmatprep.subr.mxu0 0.0
        %306 = vmatpush1.msra.mxu0 0.0
        %307 = vmatprep.subr.mxu0 0.0
        %308 = vmatpush1.msra.mxu0 0.0
        %309 = vmatprep.subr.mxu0 0.0
        %310 = vmatpush1.msra.mxu0 0.0
        %311 = vmatprep.subr.mxu0 0.0
        %312 = vmatpush1.msra.mxu0 0.0
        %313 = vmatprep.subr.mxu0 0.0
        %314 = vmatpush1.msra.mxu0 0.0
        %315 = vmatprep.subr.mxu0 0.0
        %316 = vmatpush1.msra.mxu0 0.0
        %317 = vmatprep.subr.mxu0 0.0
        %318 = vmatpush1.msra.mxu0 0.0
        %319 = vmatprep.subr.mxu0 0.0
        %320 = vmatpush1.msra.mxu0 0.0
        %321 = vmatprep.subr.mxu0 0.0
        %322 = vmatpush1.msra.mxu0 0.0
        %323 = vmatprep.subr.mxu0 0.0
        %324 = vmatpush1.msra.mxu0 0.0
        %325 = vmatprep.subr.mxu0 0.0
        %326 = vmatpush1.msra.mxu0 0.0
        %327 = vmatprep.subr.mxu0 0.0
        %328 = vmatpush1.msra.mxu0 0.0
        %329 = vmatprep.subr.mxu0 0.0
        %330 = vmatpush1.msra.mxu0 0.0
        %331 = vmatprep.subr.mxu0 0.0
        %332 = vmatpush1.msra.mxu0 0.0
        %333 = vmatprep.subr.mxu0 0.0
        %334 = vmatpush1.msra.mxu0 0.0
        %335 = vmatprep.subr.mxu0 0.0
        %336 = vmatpush1.msra.mxu0 0.0
        %337 = vmatprep.subr.mxu0 0.0
        %338 = vmatpush1.msra.mxu0 0.0
        %339 = vmatprep.subr.mxu0 0.0
        %340 = vmatpush1.msra.mxu0 0.0
        %341 = vmatprep.subr.mxu0 0.0
        %342 = vmatpush1.msra.mxu0 0.0
        %343 = vmatprep.subr.mxu0 0.0
        %344 = vmatpush1.msra.mxu0 0.0
        %345 = vmatprep.subr.mxu0 0.0
        %346 = vmatpush1.msra.mxu0 0.0
        %347 = vmatprep.subr.mxu0 0.0
        %348 = vmatpush1.msra.mxu0 0.0
        %349 = vmatprep.mubr.f32.mxu0 0.0
        %350 = vmatmul.mubr.f32.gmra.mrb[0].mxu0 %v279
        %v351 = vpop.f32.mrb[0].mxu0
        %v352 = vadd.f32 0.0, %v351
        %v353 = vpop.f32.mrb[0].mxu0
        %354 = vdwg.mxu0
        %v355 = vadd.f32 %v274, %v352
        %356 = vst [vmem:[#allocation2] sm:$0xff] %v355
        // Predicated region
        $region37: #{tpu_custom_call.1} parent=31 // pred_check
          %p357 = pneg %p269
        $region38: #{tpu_custom_call.1} parent=31 // pred_check_branch
          %359 = sbr.rel (%p357) target = $region40
        $region39: #{tpu_custom_call.1} parent=31 // pred_region
          %v360 = vld [vmem:[#allocation2] sm:$0xff]
          %v361 = vld [vmem:[%s268] sm:$0xff]
          %363 = vset.pattern.permute.xlu0 0
          %364 = vperm.xlu0 %363, %v361
          %v365 = vpop.permute.xlu0 %364
          %v367 = vadd.f32 %v360, %v365
          %368 = vst [vmem:[%s245] sm:$0xff] %v367
        $region40: #{tpu_custom_call.1} parent=31 // pred_fallthru
          _
        %s369 = sand.u32 %s139, 1
        %s370 = scalar_lea.sflag [#allocation4], %s369
        %s371 = sand.u32 %s139, 1
        %s372 = smul.addr %s371, 8
        %s373 = scalar_lea.vmem [#allocation3], %s372
        // Predicated region
        $region41: #{tpu_custom_call.1} parent=31 // pred_check
          %p374 = pneg %p149
        $region42: #{tpu_custom_call.1} parent=31 // pred_check_branch
          %376 = sbr.rel (%p374) target = $region44
        $region43: #{tpu_custom_call.1} parent=31 // pred_region
          %s378 = ssub.s32 128, 128
          %379 = vsyncadd %s370, %s378
          %s380 = smul.addr %s24, 2
          %s381 = sadd.s32 %s25, %s380
          %s382 = smul.addr %s23, 2
          %s383 = sadd.s32 %s381, %s382
          %s384 = smul.addr %s383, 128
          %s385 = scalar_lea.hbm %s3, %s384
          %s387 = sshll.u32 %s373, 4
          %s388 = int_to_ptr.vmem [resolvable:$true] %s387
          %390 = dma.vmem_to_hbm [thread:$0]  %s388, 128, %s385, %s370
        $region44: #{tpu_custom_call.1} parent=31 // pred_fallthru
          _
      $region32: #{tpu_custom_call.1} parent=5 // pred_fallthru
        _
      %p391 = scmp.le.s32.totalorder 2, %s12
      // Predicated region
      $region45: #{tpu_custom_call.1} parent=5 // pred_check
        %p392 = pneg %p391
      $region46: #{tpu_custom_call.1} parent=5 // pred_check_branch
        %394 = sbr.rel (%p392) target = $region48
      $region47: #{tpu_custom_call.1} parent=5 // pred_region
        %s395 = ssub.s32 %s12, 2
        // Predicated region
        $region49: #{tpu_custom_call.1} parent=47 // pred_check
          %p396 = pneg %p155
        $region50: #{tpu_custom_call.1} parent=47 // pred_check_branch
          %398 = sbr.rel (%p396) target = $region52
        $region51: #{tpu_custom_call.1} parent=47 // pred_region
          %s399 = sand.u32 %s140, 1
          %s400 = scalar_lea.sflag [#allocation4], %s399
          %s401 = sand.u32 %s140, 1
          %s402 = smul.addr %s401, 8
          %s403 = scalar_lea.vmem [#allocation3], %s402
          %404 = dma.done %s400, 128
        $region52: #{tpu_custom_call.1} parent=47 // pred_fallthru
          _
      $region48: #{tpu_custom_call.1} parent=5 // pred_fallthru
        _
    $region6: #{tpu_custom_call.1} parent=1 // loop_footer
      %s16 = sadd.s32 1, %s12
    $region7: #{tpu_custom_call.1} parent=1 // loop_footer_branch
      %11 = sbr.rel target = $region3
    $region8: #{tpu_custom_call.1} parent=1 // loop_exit
      _
    %405 = vsyncpa [#allocation4], 1
    %s406 = scalar_lea.sflag [#allocation4], 1
    %407 = vsyncpa %s406, 1

</llo_original>
